<compile_context>
chip_gen: v6e
topology: v6e:2x2x1
jax: 0.10.0
libtpu: 0.0.40
codegen_flags: <defaults>
</compile_context>

<pallas_src>
import jax
import jax.numpy as jnp
from jax.experimental import pallas as pl
from jax.experimental.pallas import tpu as pltpu

IN_FEATURES = 10
OUT_FEATURES = 3

# Lane-aligned padded sizes (one full vreg lane width).
PAD_IN = 128
PAD_OUT = 128

# Batch tile for the gridded (large-B) path: 512 x 128 f32 = 256 KiB / buffer.
BATCH_TILE = 512


def _linear_kernel(x_ref, w_ref, b_ref, o_ref):
    # x: (TM, 128), w: (128, 128), b: (1, 128), out: (TM, 128).
    # Full-vreg lane-dense tiles -> unmasked vld/vst; MXU matmul with f32
    # accumulation; bias add runs on the VPU (free filler under the MXU/DMA).
    y = jnp.dot(x_ref[...], w_ref[...], preferred_element_type=jnp.float32)
    o_ref[...] = (y + b_ref[...]).astype(o_ref.dtype)


def _pad_params(w_pt, b):
    """PyTorch-layout params (OUT, IN)/(OUT,) -> lane-dense (128,128)/(1,128)."""
    w_pad = jnp.zeros((PAD_IN, PAD_OUT), jnp.float32)
    w_pad = w_pad.at[:IN_FEATURES, :OUT_FEATURES].set(
        w_pt.T.astype(jnp.float32))
    b_pad = jnp.zeros((1, PAD_OUT), jnp.float32)
    b_pad = b_pad.at[0, :OUT_FEATURES].set(b.astype(jnp.float32))
    return w_pad, b_pad


@jax.jit
def linear_forward(x, w_pt, b):
    """SimpleModel forward: y = x @ w_pt.T + b  (torch.nn.Linear(10, 3)).

    x:    (B, 10) float32
    w_pt: (3, 10) float32   (PyTorch weight layout)
    b:    (3,)    float32
    """
    B = x.shape[0]
    w_pad, b_pad = _pad_params(w_pt, b)

    if B <= 1024:
        # Small batch: single block, NO grid. Whole arrays live in VMEM.
        B_pad = max(8, -(-B // 8) * 8)  # round batch up to a sublane multiple
        x_pad = jnp.zeros((B_pad, PAD_IN), jnp.float32)
        x_pad = x_pad.at[:B, :IN_FEATURES].set(x.astype(jnp.float32))
        vmem = pl.BlockSpec(memory_space=pltpu.MemorySpace.VMEM)
        y_pad = pl.pallas_call(
            _linear_kernel,
            out_shape=jax.ShapeDtypeStruct((B_pad, PAD_OUT), jnp.float32),
            in_specs=[vmem, vmem, vmem],
            out_specs=vmem,
        )(x_pad, w_pad, b_pad)
    else:
        # Large batch: tile the batch axis; parallel semantics lets the grid
        # shard across v7x's 2 TensorCores.
        B_pad = -(-B // BATCH_TILE) * BATCH_TILE
        x_pad = jnp.zeros((B_pad, PAD_IN), jnp.float32)
        x_pad = x_pad.at[:B, :IN_FEATURES].set(x.astype(jnp.float32))
        y_pad = pl.pallas_call(
            _linear_kernel,
            out_shape=jax.ShapeDtypeStruct((B_pad, PAD_OUT), jnp.float32),
            grid=(B_pad // BATCH_TILE,),
            in_specs=[
                pl.BlockSpec((BATCH_TILE, PAD_IN), lambda i: (i, 0)),
                pl.BlockSpec((PAD_IN, PAD_OUT), lambda i: (0, 0)),
                pl.BlockSpec((1, PAD_OUT), lambda i: (0, 0)),
            ],
            out_specs=pl.BlockSpec((BATCH_TILE, PAD_OUT), lambda i: (i, 0)),
            compiler_params=pltpu.CompilerParams(
                dimension_semantics=("parallel",)),
        )(x_pad, w_pad, b_pad)

    # Strip padding outside the kernel (keeps the kernel's stores lane-dense).
    return y_pad[:B, :OUT_FEATURES].astype(x.dtype)


if __name__ == "__main__":
    key = jax.random.PRNGKey(0)
    kx, kw, kb = jax.random.split(key, 3)

    batch = 8
    # Mimic torch's uniform(-1/sqrt(IN), 1/sqrt(IN)) init, PyTorch weight layout.
    bound = 1.0 / (IN_FEATURES ** 0.5)
    w_pt = jax.random.uniform(kw, (OUT_FEATURES, IN_FEATURES), jnp.float32,
                              minval=-bound, maxval=bound)
    b = jax.random.uniform(kb, (OUT_FEATURES,), jnp.float32,
                           minval=-bound, maxval=bound)
    x = jax.random.normal(kx, (batch, IN_FEATURES), jnp.float32)

    y = linear_forward(x, w_pt, b)
    jax.block_until_ready(y)

    # Reference check against plain JAX (== torch's x @ W.T + b).
    y_ref = x @ w_pt.T + b
    assert y.shape == (batch, OUT_FEATURES)
    assert jnp.allclose(y, y_ref, atol=1e-5, rtol=1e-5)

    print("KERNEL_OK")
</pallas_src>

<mosaic_0001>
module attributes {stable_mosaic.version = 11 : i64} {
  func.func @_linear_kernel(%arg0: memref<8x128xf32, #tpu.memory_space<vmem>>, %arg1: memref<128x128xf32, #tpu.memory_space<vmem>>, %arg2: memref<1x128xf32, #tpu.memory_space<vmem>>, %arg3: memref<8x128xf32, #tpu.memory_space<vmem>>) attributes {dimension_semantics = [], scalar_prefetch = 0 : i64, scratch_operands = 0 : i64, tpu.core_type = #tpu.core_type<tc>} {
    %c0 = arith.constant 0 : index
    %c0_0 = arith.constant 0 : index
    %0 = vector.load %arg0[%c0, %c0_0] : memref<8x128xf32, #tpu.memory_space<vmem>>, vector<8x128xf32>
    %c0_1 = arith.constant 0 : index
    %c0_2 = arith.constant 0 : index
    %1 = vector.load %arg1[%c0_1, %c0_2] : memref<128x128xf32, #tpu.memory_space<vmem>>, vector<128x128xf32>
    %cst = arith.constant dense<0.000000e+00> : vector<8x128xf32>
    %2 = tpu.matmul %0, %1, %cst {dimension_numbers = #tpu.dot_dimension_numbers<[1], [0], [0], [1], [0, 0, 1, 1], [], []>} : vector<8x128xf32>, vector<128x128xf32>, vector<8x128xf32> -> vector<8x128xf32>
    %c0_3 = arith.constant 0 : index
    %c0_4 = arith.constant 0 : index
    %3 = vector.load %arg2[%c0_3, %c0_4] : memref<1x128xf32, #tpu.memory_space<vmem>>, vector<1x128xf32>
    %4 = vector.broadcast %3 : vector<1x128xf32> to vector<8x128xf32>
    %5 = arith.addf %2, %4 : vector<8x128xf32>
    %c0_5 = arith.constant 0 : index
    %c0_6 = arith.constant 0 : index
    %6 = vector.load %arg3[%c0_5, %c0_6] : memref<8x128xf32, #tpu.memory_space<vmem>>, vector<8x128xf32>
    tpu.vector_store %arg3[%c0_5, %c0_6], %5 {strides = array<i32>} : memref<8x128xf32, #tpu.memory_space<vmem>>, vector<8x128xf32>,
    return
  }
}

</mosaic_0001>

<llo_original>
// kernel: linear_forward.1
$region0: #{linear_forward.1}
  #allocation0 [shape = 'u32[]', space=smem, size = 0x4, offset = 0x4, fixed_abs, tag = 'smem constant byte address 0x4 - core index']
  #allocation1 [shape = 'u32[144,128]{1,0:T(1,128)}', space=vmem, size = 0x12000, scoped, tag = 'internal scratch']
  %s0 = inlined_call_operand.vmem [shape: f32[8,128], index: 0, kind: input, shape index: {}]
  %s1 = inlined_call_operand.vmem [shape: f32[128,128], index: 1, kind: input, shape index: {}]
  %s2 = inlined_call_operand.vmem [shape: f32[1,128], index: 2, kind: input, shape index: {}]
  %s3 = inlined_call_operand.vmem [shape: f32[8,128], index: 3, kind: output, shape index: {}]
  %s4 = sld [smem:[#allocation0]]
  $region22: #{linear_forward.1} parent=0
    _
  %s6 = ssub.s32 1, %s4
  %s7 = scalar_select 0, %s6, %s4
  // Predicated region
  $region2: #{linear_forward.1} parent=0 // pred_check
    _
  $region3: #{linear_forward.1} parent=0 // pred_check_branch
    %9 = sbr.rel (0) target = $region5
  $region4: #{linear_forward.1} parent=0 // pred_region
    _
  $region5: #{linear_forward.1} parent=0 // pred_fallthru
    _
  // Predicated region
  $region6: #{linear_forward.1} parent=0 // pred_check
    _
  $region7: #{linear_forward.1} parent=0 // pred_check_branch
    %11 = sbr.rel (0) target = $region9
  $region8: #{linear_forward.1} parent=0 // pred_region
    _
  $region9: #{linear_forward.1} parent=0 // pred_fallthru
    _
  // Predicated region
  $region10: #{linear_forward.1} parent=0 // pred_check
    _
  $region11: #{linear_forward.1} parent=0 // pred_check_branch
    %13 = sbr.rel (0) target = $region13
  $region12: #{linear_forward.1} parent=0 // pred_region
    _
  $region13: #{linear_forward.1} parent=0 // pred_fallthru
    _
  %v14 = vld [vmem:[%s0] sm:$0xff]
  %v15 = vld [vmem:[%s1] sm:$0xff]
  %v16 = vld [vmem:[%s1 + $0x8] sm:$0xff]
  %v17 = vld [vmem:[%s1 + $0x10] sm:$0xff]
  %v18 = vld [vmem:[%s1 + $0x18] sm:$0xff]
  %v19 = vld [vmem:[%s1 + $0x20] sm:$0xff]
  %v20 = vld [vmem:[%s1 + $0x28] sm:$0xff]
  %v21 = vld [vmem:[%s1 + $0x30] sm:$0xff]
  %v22 = vld [vmem:[%s1 + $0x38] sm:$0xff]
  %v23 = vld [vmem:[%s1 + $0x40] sm:$0xff]
  %v24 = vld [vmem:[%s1 + $0x48] sm:$0xff]
  %v25 = vld [vmem:[%s1 + $0x50] sm:$0xff]
  %v26 = vld [vmem:[%s1 + $0x58] sm:$0xff]
  %v27 = vld [vmem:[%s1 + $0x60] sm:$0xff]
  %v28 = vld [vmem:[%s1 + $0x68] sm:$0xff]
  %v29 = vld [vmem:[%s1 + $0x70] sm:$0xff]
  %v30 = vld [vmem:[%s1 + $0x78] sm:$0xff]
  %v31 = vld [vmem:[%s2] sm:$0x1]
  %v33 = vlaneseq
  %v34 = vshrl.u32 %v33, 7
  %v35 = vsub.s32 0, %v34
  %v36 = vrot.slane %v31, %v35
  %38 = vmatprep.subr.mxu0 0.0
  %39 = vmatpush1.msra.mxu0 %v30
  %40 = vmatprep.subr.mxu0 0.0
  %41 = vmatpush1.msra.mxu0 %v29
  %42 = vmatprep.subr.mxu0 0.0
  %43 = vmatpush1.msra.mxu0 %v28
  %44 = vmatprep.subr.mxu0 0.0
  %45 = vmatpush1.msra.mxu0 %v27
  %46 = vmatprep.subr.mxu0 0.0
  %47 = vmatpush1.msra.mxu0 %v26
  %48 = vmatprep.subr.mxu0 0.0
  %49 = vmatpush1.msra.mxu0 %v25
  %50 = vmatprep.subr.mxu0 0.0
  %51 = vmatpush1.msra.mxu0 %v24
  %52 = vmatprep.subr.mxu0 0.0
  %53 = vmatpush1.msra.mxu0 %v23
  %54 = vmatprep.subr.mxu0 0.0
  %55 = vmatpush1.msra.mxu0 %v22
  %56 = vmatprep.subr.mxu0 0.0
  %57 = vmatpush1.msra.mxu0 %v21
  %58 = vmatprep.subr.mxu0 0.0
  %59 = vmatpush1.msra.mxu0 %v20
  %60 = vmatprep.subr.mxu0 0.0
  %61 = vmatpush1.msra.mxu0 %v19
  %62 = vmatprep.subr.mxu0 0.0
  %63 = vmatpush1.msra.mxu0 %v18
  %64 = vmatprep.subr.mxu0 0.0
  %65 = vmatpush1.msra.mxu0 %v17
  %66 = vmatprep.subr.mxu0 0.0
  %67 = vmatpush1.msra.mxu0 %v16
  %68 = vmatprep.subr.mxu0 0.0
  %69 = vmatpush1.msra.mxu0 %v15
  %70 = vmatprep.subr.mxu0 0.0
  %71 = vmatpush2.msra.mxu0 0.0
  %72 = vmatprep.subr.mxu0 0.0
  %73 = vmatpush2.msra.mxu0 0.0
  %74 = vmatprep.subr.mxu0 0.0
  %75 = vmatpush2.msra.mxu0 0.0
  %76 = vmatprep.subr.mxu0 0.0
  %77 = vmatpush2.msra.mxu0 0.0
  %78 = vmatprep.subr.mxu0 0.0
  %79 = vmatpush2.msra.mxu0 0.0
  %80 = vmatprep.subr.mxu0 0.0
  %81 = vmatpush2.msra.mxu0 0.0
  %82 = vmatprep.subr.mxu0 0.0
  %83 = vmatpush2.msra.mxu0 0.0
  %84 = vmatprep.subr.mxu0 0.0
  %85 = vmatpush2.msra.mxu0 0.0
  %86 = vmatprep.subr.mxu0 0.0
  %87 = vmatpush2.msra.mxu0 0.0
  %88 = vmatprep.subr.mxu0 0.0
  %89 = vmatpush2.msra.mxu0 0.0
  %90 = vmatprep.subr.mxu0 0.0
  %91 = vmatpush2.msra.mxu0 0.0
  %92 = vmatprep.subr.mxu0 0.0
  %93 = vmatpush2.msra.mxu0 0.0
  %94 = vmatprep.subr.mxu0 0.0
  %95 = vmatpush2.msra.mxu0 0.0
  %96 = vmatprep.subr.mxu0 0.0
  %97 = vmatpush2.msra.mxu0 0.0
  %98 = vmatprep.subr.mxu0 0.0
  %99 = vmatpush2.msra.mxu0 0.0
  %100 = vmatprep.subr.mxu0 0.0
  %101 = vmatpush2.msra.mxu0 0.0
  %102 = vmatprep.mubr.f32.mxu0 0.0
  %103 = vmatmul.mubr.f32.gmra.mxu0 %v14
  %v104 = vpop.f32.mrf.mxu0
  %v105 = vadd.f32 %v36, %v104
  %v106 = vpop.f32.mrf.mxu0
  %107 = vdwg.mxu0
  %108 = vst [vmem:[%s3] sm:$0xff] %v105
  // Predicated region
  $region14: #{linear_forward.1} parent=0 // pred_check
    _
  $region15: #{linear_forward.1} parent=0 // pred_check_branch
    %110 = sbr.rel (0) target = $region17
  $region16: #{linear_forward.1} parent=0 // pred_region
    _
  $region17: #{linear_forward.1} parent=0 // pred_fallthru
    _
  // Predicated region
  $region18: #{linear_forward.1} parent=0 // pred_check
    _
  $region19: #{linear_forward.1} parent=0 // pred_check_branch
    %112 = sbr.rel (0) target = $region21
  $region20: #{linear_forward.1} parent=0 // pred_region
    _
  $region21: #{linear_forward.1} parent=0 // pred_fallthru
    _

</llo_original>
